<compile_context>
chip_gen: v6e
topology: v6e:2x2x1
jax: 0.10.0
libtpu: 0.0.40
codegen_flags: <defaults>
</compile_context>

<pallas_src>
import numpy as np
import jax
import jax.numpy as jnp
from jax.experimental import pallas as pl
from jax.experimental.pallas import tpu as pltpu


# ----------------------------------------------------------------------------
# Helpers reproduced from graspnetAPI / pointnet2 utils (plain numpy / JAX glue)
# ----------------------------------------------------------------------------
def generate_grasp_views(N=300, phi=(np.sqrt(5) - 1) / 2, center=np.zeros(3), r=1.0):
    """Fibonacci-sphere grasp views, identical to the torch reference."""
    idxs = np.arange(N, dtype=np.float64)
    zi = (2.0 * idxs + 1.0) / N - 1.0
    xi = np.sqrt(1.0 - zi ** 2) * np.cos(2.0 * idxs * np.pi * phi)
    yi = np.sqrt(1.0 - zi ** 2) * np.sin(2.0 * idxs * np.pi * phi)
    views = r * np.stack([xi, yi, zi], axis=-1) + center
    return jnp.asarray(views, dtype=jnp.float32)           # (N, 3)


def batch_viewpoint_params_to_matrix(batch_towards, batch_angle):
    """JAX port of graspnetAPI's batch_viewpoint_params_to_matrix."""
    axis_x = batch_towards                                  # (B, 3)
    zeros = jnp.zeros(axis_x.shape[0], dtype=axis_x.dtype)
    ones = jnp.ones_like(zeros)
    axis_y = jnp.stack([-axis_x[:, 1], axis_x[:, 0], zeros], axis=-1)
    mask_y = jnp.linalg.norm(axis_y, axis=-1) == 0
    axis_y = axis_y.at[:, 1].set(jnp.where(mask_y, 1.0, axis_y[:, 1]))
    axis_x = axis_x / jnp.linalg.norm(axis_x, axis=-1, keepdims=True)
    axis_y = axis_y / jnp.linalg.norm(axis_y, axis=-1, keepdims=True)
    axis_z = jnp.cross(axis_x, axis_y)
    sin = jnp.sin(batch_angle)
    cos = jnp.cos(batch_angle)
    R1 = jnp.stack([ones, zeros, zeros,
                    zeros, cos, -sin,
                    zeros, sin, cos], axis=-1).reshape(-1, 3, 3)
    R2 = jnp.stack([axis_x, axis_y, axis_z], axis=-1)
    return jnp.matmul(R2, R1)                               # (B, 3, 3)


def _round_up(x, m):
    return ((x + m - 1) // m) * m


def _vmem_budget():
    """Generation-aware VMEM sizing: (tile budget, scoped-limit cap) in bytes."""
    try:
        phys = int(getattr(pltpu.get_tpu_info(), "vmem_capacity_bytes",
                           64 * 1024 * 1024))
    except Exception:                                        # pragma: no cover
        phys = 64 * 1024 * 1024
    if phys >= 128 * 1024 * 1024:                            # v5e / v6e
        return 48 * 1024 * 1024, 64 * 1024 * 1024
    return 24 * 1024 * 1024, 40 * 1024 * 1024                # v7x (64 MiB physical)


# ----------------------------------------------------------------------------
# Pallas kernel: conv1(1x1)+ReLU (channel-major) + conv2(1x1) emitted transposed
# ----------------------------------------------------------------------------
def _approach_kernel(x_ref, w1_ref, b1_ref, w2t_ref, b2_ref, res_ref, score_ref):
    x = x_ref[0]                                                     # (C, tile_w)
    # conv1 (kernel size 1): H = relu(W1 @ X + b1)  -> res_features tile (NCW)
    h = jnp.dot(w1_ref[...], x, preferred_element_type=jnp.float32) + b1_ref[...]
    h = jnp.maximum(h, 0.0)
    res_ref[0] = h.astype(res_ref.dtype)
    # conv2 (kernel size 1), emitted already transposed (NWC layout) so no XLA
    # transpose of the score tensor is needed:  S^T = H^T @ W2^T + b2.
    # The H^T transpose is XLU work, hidden under the HBM-bound step time.
    ht = jnp.transpose(h.astype(w2t_ref.dtype))                      # (tile_w, C)
    s = jnp.dot(ht, w2t_ref[...], preferred_element_type=jnp.float32) + b2_ref[...]
    score_ref[0] = s.astype(score_ref.dtype)                         # (tile_w, V)


def _run_approach_kernel(seed_features, w1, b1, w2, b2, *, tile_w=None,
                         compute_dtype=jnp.float32):
    """seed_features: (bs, C, W).

    Returns res (bs, C, W) in compute_dtype and view_score (bs, W, V) f32.
    """
    bs, C, W = seed_features.shape
    V = w2.shape[0]
    comp_bytes = jnp.dtype(compute_dtype).itemsize
    budget, limit_cap = _vmem_budget()

    # --- lane-dense tile along the point axis (auto-grown to the VMEM budget) --
    W128 = _round_up(W, 128)
    units = W128 // 128
    # Per point-column VMEM: double-buffered pipeline blocks (x in, res & score
    # out) + live in-kernel intermediates (h f32, h^T, s f32).
    per_col = (2 * (2 * C * comp_bytes + V * 4)
               + C * 4 + C * comp_bytes + V * 4)
    max_units = max(1, budget // (128 * per_col))
    req_units = units if tile_w is None else max(1, _round_up(tile_w, 128) // 128)
    t_units = max(1, min(units, max_units, req_units))
    while units % t_units:            # snap to a divisor of W128: no extra padding
        t_units -= 1
    if bs == 1 and units >= 2 and units // t_units < 2:
        # Keep >=2 steps along a "parallel" axis so both v7x TensorCores get work.
        t_units = max(d for d in range(1, units // 2 + 1) if units % d == 0)
    tile_w = 128 * t_units
    W_pad = W128

    # --- pad / cast operands (weights are tiny) --------------------------------
    x = seed_features
    if W_pad != W:
        # TODO(synk): with the real GraspNet gp_num (1024) this pad and the final
        # slices vanish; for ragged gp_num they cost one extra pass over x / res.
        x = jnp.pad(x, ((0, 0), (0, 0), (0, W_pad - W)))
    if x.dtype != compute_dtype:
        x = x.astype(compute_dtype)
    w1_c = w1.astype(compute_dtype)                              # (C, C)
    w2t_c = jnp.transpose(w2).astype(compute_dtype)              # (C, V), tiny
    b1_c = b1.reshape(C, 1).astype(jnp.float32)
    b2_c = b2.reshape(1, V).astype(jnp.float32)

    grid = (bs, W_pad // tile_w)
    out_shape = (
        jax.ShapeDtypeStruct((bs, C, W_pad), compute_dtype),     # res_features NCW
        jax.ShapeDtypeStruct((bs, W_pad, V), jnp.float32),       # view_score  NWC
    )
    in_specs = [
        pl.BlockSpec((1, C, tile_w), lambda b, j: (b, 0, j)),    # x tile
        pl.BlockSpec((C, C), lambda b, j: (0, 0)),               # W1   (resident)
        pl.BlockSpec((C, 1), lambda b, j: (0, 0)),               # b1
        pl.BlockSpec((C, V), lambda b, j: (0, 0)),               # W2^T (resident)
        pl.BlockSpec((1, V), lambda b, j: (0, 0)),               # b2
    ]
    out_specs = (
        pl.BlockSpec((1, C, tile_w), lambda b, j: (b, 0, j)),
        pl.BlockSpec((1, tile_w, V), lambda b, j: (b, j, 0)),
    )

    w_bytes = (C * C + C * V) * comp_bytes + (C + V) * 4
    vmem_need = tile_w * per_col + 2 * w_bytes + (2 << 20)       # 2 MiB headroom
    if vmem_need > limit_cap:
        raise ValueError(
            f"ApproachNet kernel needs ~{vmem_need >> 20} MiB VMEM, above the "
            f"{limit_cap >> 20} MiB cap for this TPU generation; reduce feat_c "
            f"or the tile budget.")
    vmem_limit = int(min(limit_cap, max(vmem_need, 32 * 1024 * 1024)))

    flops = int(2 * bs * W_pad * C * (C + V))
    bytes_accessed = int(bs * C * W_pad * comp_bytes            # x read
                         + bs * C * W_pad * comp_bytes          # res write
                         + bs * W_pad * V * 4                   # score write
                         + w_bytes)

    res, score = pl.pallas_call(
        _approach_kernel,
        out_shape=out_shape,
        grid=grid,
        in_specs=in_specs,
        out_specs=out_specs,
        compiler_params=pltpu.CompilerParams(
            dimension_semantics=("parallel", "parallel"),
            vmem_limit_bytes=vmem_limit),
        cost_estimate=pl.CostEstimate(
            flops=flops, transcendentals=0, bytes_accessed=bytes_accessed),
    )(x, w1_c, b1_c, w2t_c, b2_c)

    if W_pad != W:
        res = res[:, :, :W]
        score = score[:, :W, :]
    return res, score


# ----------------------------------------------------------------------------
# ApproachNet forward (JAX wrapper around the kernel)
# ----------------------------------------------------------------------------
def approach_net_forward(seed_features, params, num_view, is_training,
                         rng_key=None, tile_w=None, compute_dtype=jnp.float32):
    """seed_features: (bs, feat_c, gp_num). Returns (end_points, res_features)."""
    bs, feat_c, gp_num = seed_features.shape
    end_points = {}

    res_features, view_score = _run_approach_kernel(
        seed_features, params["w1"], params["b1"], params["w2"], params["b2"],
        tile_w=tile_w, compute_dtype=compute_dtype)
    # res_features is already NCW = (bs, feat_c, gp_num);
    # view_score is already (bs, gp_num, num_view) — no XLA transposes needed.
    end_points["view_score"] = view_score

    if is_training:
        # TODO(synk): torch.multinomial's RNG stream cannot be matched bit-exactly;
        # we sample the same categorical distribution via the Gumbel-max trick.
        vs = jax.lax.stop_gradient(view_score)
        vs_max = jnp.max(vs, axis=2, keepdims=True)
        vs_min = jnp.min(vs, axis=2, keepdims=True)
        vs_norm = (vs - vs_min) / (vs_max - vs_min + 1e-6)
        vs_flat = vs_norm.reshape(bs * gp_num, -1)
        logits = jnp.log(jnp.maximum(vs_flat, 1e-10))   # all-constant rows stay finite
        g = jax.random.gumbel(rng_key, logits.shape, dtype=logits.dtype)
        top_view_inds = jnp.argmax(logits + g, axis=-1).reshape(bs, gp_num)
    else:
        # argmax over <=300 lanes is trivially cheap in XLA (first-index ties,
        # same convention as jnp/torch first-occurrence behaviour).
        top_view_inds = jnp.argmax(view_score, axis=-1)          # (bs, gp_num)
        template_views = params["template_views"]                # (num_view, 3)
        vp_xyz = template_views[top_view_inds]                   # (bs, gp_num, 3)
        vp_xyz_ = vp_xyz.reshape(-1, 3)
        batch_angle = jnp.zeros(vp_xyz_.shape[0], dtype=vp_xyz_.dtype)
        vp_rot = batch_viewpoint_params_to_matrix(-vp_xyz_, batch_angle)
        vp_rot = vp_rot.reshape(bs, gp_num, 3, 3)
        end_points["grasp_top_view_xyz"] = vp_xyz
        end_points["grasp_top_view_rot"] = vp_rot

    end_points["grasp_top_view_inds"] = top_view_inds
    return end_points, res_features


# ----------------------------------------------------------------------------
# Deterministic parameter init (Conv1d weights (out, in, 1) -> stored as (out, in))
# ----------------------------------------------------------------------------
def init_params(key, num_view, feat_c):
    k1, k2, k3, k4 = jax.random.split(key, 4)
    s1 = 1.0 / np.sqrt(feat_c)
    params = {
        "w1": jax.random.uniform(k1, (feat_c, feat_c), jnp.float32, -s1, s1),
        "b1": jax.random.uniform(k2, (feat_c,), jnp.float32, -s1, s1),
        "w2": jax.random.uniform(k3, (num_view, feat_c), jnp.float32, -s1, s1),
        "b2": jax.random.uniform(k4, (num_view,), jnp.float32, -s1, s1),
        "template_views": generate_grasp_views(num_view),
    }
    return params


# ----------------------------------------------------------------------------
# Pure-JAX reference (for correctness check)
# ----------------------------------------------------------------------------
def reference_forward(seed_features, params, num_view):
    x = jnp.transpose(seed_features, (0, 2, 1))                   # (bs, N, C)
    h = jax.nn.relu(jnp.einsum("bnc,oc->bno", x, params["w1"]) + params["b1"])
    s = jnp.einsum("bnc,oc->bno", h, params["w2"]) + params["b2"]
    res_features = jnp.transpose(h, (0, 2, 1))                    # (bs, C, N)
    top = jnp.argmax(s, axis=-1)
    return res_features, s, top


if __name__ == "__main__":
    bs, feat_c, gp_num, num_view = 2, 32, 200, 8

    key = jax.random.PRNGKey(0)
    k_feat, k_param = jax.random.split(key)
    seed_features = jax.random.normal(k_feat, (bs, feat_c, gp_num), jnp.float32)
    params = init_params(k_param, num_view, feat_c)

    # Inference path (f32): exercises gp_num padding (200 -> 256) and a
    # multi-step (bs, 2) parallel grid (tile_w override = 128).
    end_points, res_features = approach_net_forward(
        seed_features, params, num_view, is_training=False, tile_w=128)
    jax.block_until_ready(res_features)
    jax.block_until_ready(end_points["grasp_top_view_rot"])

    # Correctness check vs pure-JAX reference.
    ref_res, ref_score, ref_top = reference_forward(seed_features, params, num_view)
    np.testing.assert_allclose(np.asarray(res_features), np.asarray(ref_res),
                               rtol=1e-5, atol=1e-5)
    np.testing.assert_allclose(np.asarray(end_points["view_score"]),
                               np.asarray(ref_score), rtol=1e-5, atol=1e-5)
    np.testing.assert_array_equal(np.asarray(end_points["grasp_top_view_inds"]),
                                  np.asarray(ref_top))

    # Shape sanity (matches the torch module's outputs).
    assert end_points["view_score"].shape == (bs, gp_num, num_view)
    assert end_points["grasp_top_view_inds"].shape == (bs, gp_num)
    assert end_points["grasp_top_view_xyz"].shape == (bs, gp_num, 3)
    assert end_points["grasp_top_view_rot"].shape == (bs, gp_num, 3, 3)
    assert res_features.shape == (bs, feat_c, gp_num)

    # bf16 MXU-operand path: x/weights AND the res_features output are bf16
    # (halves the dominant HBM traffic; f32 accumulation kept in-kernel).
    ep_bf16, res_bf16 = approach_net_forward(
        seed_features, params, num_view, is_training=False, tile_w=256,
        compute_dtype=jnp.bfloat16)
    jax.block_until_ready(res_bf16)
    assert res_bf16.dtype == jnp.bfloat16
    np.testing.assert_allclose(np.asarray(res_bf16.astype(jnp.float32)),
                               np.asarray(ref_res), rtol=5e-2, atol=5e-2)
    np.testing.assert_allclose(np.asarray(ep_bf16["view_score"]),
                               np.asarray(ref_score), rtol=5e-2, atol=5e-2)

    # Training path (Gumbel-max sampling in the JAX glue), auto-grown tile
    # (exercises the generation-aware VMEM budget via pltpu.get_tpu_info()).
    ep_train, _ = approach_net_forward(
        seed_features, params, num_view, is_training=True,
        rng_key=jax.random.PRNGKey(42), tile_w=None)
    jax.block_until_ready(ep_train["grasp_top_view_inds"])
    assert ep_train["grasp_top_view_inds"].shape == (bs, gp_num)

    print("KERNEL_OK")
</pallas_src>

<mosaic_0001>
module attributes {stable_mosaic.version = 11 : i64} {
  func.func @_approach_kernel(%arg0: i32, %arg1: i32, %arg2: memref<1x32x128xf32, #tpu.memory_space<vmem>>, %arg3: memref<32x32xf32, #tpu.memory_space<vmem>>, %arg4: memref<32x1xf32, #tpu.memory_space<vmem>>, %arg5: memref<32x8xf32, #tpu.memory_space<vmem>>, %arg6: memref<1x8xf32, #tpu.memory_space<vmem>>, %arg7: memref<1x32x128xf32, #tpu.memory_space<vmem>>, %arg8: memref<1x128x8xf32, #tpu.memory_space<vmem>>) attributes {dimension_semantics = [#tpu.dimension_semantics<parallel>, #tpu.dimension_semantics<parallel>], iteration_bounds = array<i64: 2, 2>, scalar_prefetch = 0 : i64, scratch_operands = 0 : i64, tpu.core_type = #tpu.core_type<tc>, window_params = [{transform_indices = @transform_0, window_bounds = array<i64: 1, 32, 128>}, {pipeline_mode = #tpu.pipeline_mode<synchronous>, transform_indices = @transform_1, window_bounds = array<i64: 32, 32>}, {pipeline_mode = #tpu.pipeline_mode<synchronous>, transform_indices = @transform_2, window_bounds = array<i64: 32, 1>}, {pipeline_mode = #tpu.pipeline_mode<synchronous>, transform_indices = @transform_3, window_bounds = array<i64: 32, 8>}, {pipeline_mode = #tpu.pipeline_mode<synchronous>, transform_indices = @transform_4, window_bounds = array<i64: 1, 8>}, {transform_indices = @transform_5, window_bounds = array<i64: 1, 32, 128>}, {transform_indices = @transform_6, window_bounds = array<i64: 1, 128, 8>}]} {
    %c0 = arith.constant 0 : index
    %c0_0 = arith.constant 0 : index
    %c0_1 = arith.constant 0 : index
    %0 = vector.load %arg2[%c0, %c0_0, %c0_1] : memref<1x32x128xf32, #tpu.memory_space<vmem>>, vector<1x32x128xf32>
    %1 = vector.shape_cast %0 : vector<1x32x128xf32> to vector<32x128xf32>
    %c0_2 = arith.constant 0 : index
    %c0_3 = arith.constant 0 : index
    %2 = vector.load %arg3[%c0_2, %c0_3] : memref<32x32xf32, #tpu.memory_space<vmem>>, vector<32x32xf32>
    %cst = arith.constant dense<0.000000e+00> : vector<32x128xf32>
    %3 = tpu.matmul %2, %1, %cst {dimension_numbers = #tpu.dot_dimension_numbers<[1], [0], [0], [1], [0, 0, 1, 1], [], []>} : vector<32x32xf32>, vector<32x128xf32>, vector<32x128xf32> -> vector<32x128xf32>
    %c0_4 = arith.constant 0 : index
    %c0_5 = arith.constant 0 : index
    %4 = vector.load %arg4[%c0_4, %c0_5] : memref<32x1xf32, #tpu.memory_space<vmem>>, vector<32x1xf32>
    %5 = vector.broadcast %4 : vector<32x1xf32> to vector<32x128xf32>
    %6 = arith.addf %3, %5 : vector<32x128xf32>
    %cst_6 = arith.constant 0.000000e+00 : f32
    %7 = vector.broadcast %cst_6 : f32 to vector<32x128xf32>
    %8 = arith.maximumf %6, %7 : vector<32x128xf32>
    %c0_7 = arith.constant 0 : index
    %c0_8 = arith.constant 0 : index
    %c0_9 = arith.constant 0 : index
    %9 = vector.load %arg7[%c0_7, %c0_8, %c0_9] : memref<1x32x128xf32, #tpu.memory_space<vmem>>, vector<1x32x128xf32>
    %10 = vector.shape_cast %9 : vector<1x32x128xf32> to vector<32x128xf32>
    %11 = vector.shape_cast %8 : vector<32x128xf32> to vector<1x32x128xf32>
    tpu.vector_store %arg7[%c0_7, %c0_8, %c0_9], %11 {strides = array<i32>} : memref<1x32x128xf32, #tpu.memory_space<vmem>>, vector<1x32x128xf32>,
    %12 = tpu.transpose %8, [1, 0] : vector<32x128xf32> -> vector<128x32xf32>
    %c0_10 = arith.constant 0 : index
    %c0_11 = arith.constant 0 : index
    %13 = vector.load %arg5[%c0_10, %c0_11] : memref<32x8xf32, #tpu.memory_space<vmem>>, vector<32x8xf32>
    %cst_12 = arith.constant dense<0.000000e+00> : vector<128x8xf32>
    %14 = tpu.matmul %12, %13, %cst_12 {dimension_numbers = #tpu.dot_dimension_numbers<[1], [0], [0], [1], [0, 0, 1, 1], [], []>} : vector<128x32xf32>, vector<32x8xf32>, vector<128x8xf32> -> vector<128x8xf32>
    %c0_13 = arith.constant 0 : index
    %c0_14 = arith.constant 0 : index
    %15 = vector.load %arg6[%c0_13, %c0_14] : memref<1x8xf32, #tpu.memory_space<vmem>>, vector<1x8xf32>
    %16 = vector.broadcast %15 : vector<1x8xf32> to vector<128x8xf32>
    %17 = arith.addf %14, %16 : vector<128x8xf32>
    %c0_15 = arith.constant 0 : index
    %c0_16 = arith.constant 0 : index
    %c0_17 = arith.constant 0 : index
    %18 = vector.load %arg8[%c0_15, %c0_16, %c0_17] : memref<1x128x8xf32, #tpu.memory_space<vmem>>, vector<1x128x8xf32>
    %19 = vector.shape_cast %18 : vector<1x128x8xf32> to vector<128x8xf32>
    %20 = vector.shape_cast %17 : vector<128x8xf32> to vector<1x128x8xf32>
    tpu.vector_store %arg8[%c0_15, %c0_16, %c0_17], %20 {strides = array<i32>} : memref<1x128x8xf32, #tpu.memory_space<vmem>>, vector<1x128x8xf32>,
    return
  }
  func.func @transform_0(%arg0: i32, %arg1: i32) -> (i32, i32, i32) {
    %c0_i32 = arith.constant 0 : i32
    %c0_i32_0 = arith.constant 0 : i32
    return %arg0, %c0_i32, %arg1 : i32, i32, i32
  }
  func.func @transform_1(%arg0: i32, %arg1: i32) -> (i32, i32) {
    %c0_i32 = arith.constant 0 : i32
    %c0_i32_0 = arith.constant 0 : i32
    %c0_i32_1 = arith.constant 0 : i32
    return %c0_i32, %c0_i32_0 : i32, i32
  }
  func.func @transform_2(%arg0: i32, %arg1: i32) -> (i32, i32) {
    %c0_i32 = arith.constant 0 : i32
    %c0_i32_0 = arith.constant 0 : i32
    %c0_i32_1 = arith.constant 0 : i32
    return %c0_i32, %c0_i32_0 : i32, i32
  }
  func.func @transform_3(%arg0: i32, %arg1: i32) -> (i32, i32) {
    %c0_i32 = arith.constant 0 : i32
    %c0_i32_0 = arith.constant 0 : i32
    %c0_i32_1 = arith.constant 0 : i32
    return %c0_i32, %c0_i32_0 : i32, i32
  }
  func.func @transform_4(%arg0: i32, %arg1: i32) -> (i32, i32) {
    %c0_i32 = arith.constant 0 : i32
    %c0_i32_0 = arith.constant 0 : i32
    %c0_i32_1 = arith.constant 0 : i32
    return %c0_i32, %c0_i32_0 : i32, i32
  }
  func.func @transform_5(%arg0: i32, %arg1: i32) -> (i32, i32, i32) {
    %c0_i32 = arith.constant 0 : i32
    %c0_i32_0 = arith.constant 0 : i32
    return %arg0, %c0_i32, %arg1 : i32, i32, i32
  }
  func.func @transform_6(%arg0: i32, %arg1: i32) -> (i32, i32, i32) {
    %c0_i32 = arith.constant 0 : i32
    %c0_i32_0 = arith.constant 0 : i32
    return %arg0, %arg1, %c0_i32 : i32, i32, i32
  }
}

</mosaic_0001>

<llo_original>
// kernel: tpu_custom_call.1
$region0: #{tpu_custom_call.1}
  #allocation0 [shape = 'u32[]', space=smem, size = 0x4, offset = 0x4, fixed_abs, tag = 'smem constant byte address 0x4 - core index']
  #allocation1 [shape = 'u32[144,128]{1,0:T(1,128)}', space=vmem, size = 0x12000, scoped, tag = 'internal scratch']
  %s0 = inlined_call_operand.hbm [shape: f32[2,32,256], index: 0, kind: input, shape index: {}]
  %s1 = inlined_call_operand.vmem [shape: f32[32,32], index: 1, kind: input, shape index: {}]
  %s2 = inlined_call_operand.vmem [shape: f32[32,1], index: 2, kind: input, shape index: {}]
  %s3 = inlined_call_operand.vmem [shape: f32[32,8], index: 3, kind: input, shape index: {}]
  %s4 = inlined_call_operand.vmem [shape: f32[1,8], index: 4, kind: input, shape index: {}]
  %s5 = inlined_call_operand.hbm [shape: f32[2,32,256], index: 5, kind: output, shape index: {0}]
  %s6 = inlined_call_operand.vmem [shape: f32[2,256,8], index: 6, kind: output, shape index: {1}]
  %7 = xla_tuple %s5, %s6
  %s8 = sld [smem:[#allocation0]]
  $region65: #{tpu_custom_call.1} parent=0
    _
  %s10 = ssub.s32 1, %s8
  %s11 = scalar_select 0, %s10, %s8
  $region1: #{tpu_custom_call.1} parent=0
    #allocation2 [shape = 'u8[32768]{0}', space=vmem, size = 0x8000, scoped, tag = 'input window, operand 0']
    #allocation3 [shape = 's32[2]{0}', space=sflag, size = 0x8, scoped, tag = 'scoped memory for tpu_custom_call.1']
    #allocation4 [shape = 's32[2]{0}', space=sflag, size = 0x8, scoped, tag = 'scoped memory for tpu_custom_call.1']
    #allocation5 [shape = 'u8[32768]{0}', space=vmem, size = 0x8000, scoped, tag = 'output window, operand 0']
    %12 = vsyncpa [#allocation3], 0
    %s13 = scalar_lea.sflag [#allocation3], 1
    %14 = vsyncpa %s13, 0
    %15 = vsyncpa [#allocation4], 0
    %s16 = scalar_lea.sflag [#allocation4], 1
    %17 = vsyncpa %s16, 0
    loop: start=0, step=1, limit=6
    $region2: #{tpu_custom_call.1} parent=1 // loop_pre_header
      _
    $region3: #{tpu_custom_call.1} parent=1 // loop_header
      %s19 = sphi 0, %s23
      %p20 = scmp.ge.s32.totalorder %s19, 6
      %s26 = sphi 0, %s38
      %s27 = sphi 0, %s34
      %s28 = sphi 0, %s26
      %s29 = sphi 0, %s27
      %s30 = sphi 0, %s28
      %s31 = sphi 0, %s29
      %s43 = sphi 0, %s45
      %s46 = sphi 0, %s43
      %s47 = sphi 0, %s46
      %s63 = sphi 0, %s47
      %s67 = sphi 0, %s67
      %s69 = sphi 0, %s67
      %s70 = sphi 0, %s69
      %s84 = sphi 0, %s70
      %s88 = sphi 0, %s88
      %s90 = sphi 0, %s88
      %s91 = sphi 0, %s90
      %s105 = sphi 0, %s91
      %s109 = sphi 0, %s109
      %s111 = sphi 0, %s109
      %s112 = sphi 0, %s111
      %s126 = sphi 0, %s112
      %s130 = sphi 0, %s130
      %s132 = sphi 0, %s130
      %s133 = sphi 0, %s132
      %s147 = sphi 0, %s133
      %s155 = sphi 0, %s157
      %s158 = sphi 0, %s155
      %s159 = sphi 0, %s158
      %s175 = sphi 0, %s159
      %s183 = sphi 0, %s185
      %s186 = sphi 0, %s183
      %s187 = sphi 0, %s186
      %s203 = sphi 0, %s187
    $region4: #{tpu_custom_call.1} parent=1 // loop_header_branch
      %22 = sbr.rel (%p20) target = $region8
    $region5: #{tpu_custom_call.1} parent=1 // loop_body
      %s24 = ssub.s32 %s19, 1
      %s25 = ssub.s32 %s19, 2
      %s32 = sadd.s32 1, %s27
      %p33 = scmp.ge.s32.totalorder %s32, 2
      %s34 = scalar_select %p33, 0, %s32
      %s35 = sadd.s32 1, %s26
      %s36 = scalar_select %p33, %s35, %s26
      %p37 = scmp.ge.s32.totalorder %s36, 2
      %s38 = scalar_select %p37, 0, %s36
      %s39 = ssub.s32 %s26, %s38
      %s40 = ssub.s32 %s27, %s34
      %s41 = sor.u32 %s39, %s40
      %p42 = scmp.eq.s32.totalorder %s41, 0
      %s44 = sadd.s32 %s43, 1
      %s45 = scalar_select %p42, %s43, %s44
      %p48 = pneg %p42
      %p49 = scmp.eq.s32.totalorder %s19, 3
      %p50 = por %p48, %p49
      %p51 = scmp.ne.s32.totalorder %s43, %s46
      %p52 = scmp.eq.s32.totalorder %s19, 0
      %p53 = por %p51, %p52
      %p54 = scmp.ne.s32.totalorder %s43, %s46
      %p55 = scmp.eq.s32.totalorder %s24, 3
      %p56 = por %p54, %p55
      %p57 = scmp.ne.s32.totalorder %s46, %s47
      %p58 = scmp.eq.s32.totalorder %s24, 0
      %p59 = por %p57, %p58
      %p60 = scmp.ne.s32.totalorder %s46, %s47
      %p61 = scmp.eq.s32.totalorder %s25, 3
      %p62 = por %p60, %p61
      %p64 = scmp.ne.s32.totalorder %s47, %s63
      %p65 = scmp.eq.s32.totalorder %s25, 0
      %p66 = por %p64, %p65
      %s68 = sadd.s32 %s67, 1
      %p71 = scmp.eq.s32.totalorder %s19, 3
      %p72 = scmp.ne.s32.totalorder %s67, %s69
      %p73 = scmp.eq.s32.totalorder %s19, 0
      %p74 = por %p72, %p73
      %p75 = scmp.ne.s32.totalorder %s67, %s69
      %p76 = scmp.eq.s32.totalorder %s24, 3
      %p77 = por %p75, %p76
      %p78 = scmp.ne.s32.totalorder %s69, %s70
      %p79 = scmp.eq.s32.totalorder %s24, 0
      %p80 = por %p78, %p79
      %p81 = scmp.ne.s32.totalorder %s69, %s70
      %p82 = scmp.eq.s32.totalorder %s25, 3
      %p83 = por %p81, %p82
      %p85 = scmp.ne.s32.totalorder %s70, %s84
      %p86 = scmp.eq.s32.totalorder %s25, 0
      %p87 = por %p85, %p86
      %s89 = sadd.s32 %s88, 1
      %p92 = scmp.eq.s32.totalorder %s19, 3
      %p93 = scmp.ne.s32.totalorder %s88, %s90
      %p94 = scmp.eq.s32.totalorder %s19, 0
      %p95 = por %p93, %p94
      %p96 = scmp.ne.s32.totalorder %s88, %s90
      %p97 = scmp.eq.s32.totalorder %s24, 3
      %p98 = por %p96, %p97
      %p99 = scmp.ne.s32.totalorder %s90, %s91
      %p100 = scmp.eq.s32.totalorder %s24, 0
      %p101 = por %p99, %p100
      %p102 = scmp.ne.s32.totalorder %s90, %s91
      %p103 = scmp.eq.s32.totalorder %s25, 3
      %p104 = por %p102, %p103
      %p106 = scmp.ne.s32.totalorder %s91, %s105
      %p107 = scmp.eq.s32.totalorder %s25, 0
      %p108 = por %p106, %p107
      %s110 = sadd.s32 %s109, 1
      %p113 = scmp.eq.s32.totalorder %s19, 3
      %p114 = scmp.ne.s32.totalorder %s109, %s111
      %p115 = scmp.eq.s32.totalorder %s19, 0
      %p116 = por %p114, %p115
      %p117 = scmp.ne.s32.totalorder %s109, %s111
      %p118 = scmp.eq.s32.totalorder %s24, 3
      %p119 = por %p117, %p118
      %p120 = scmp.ne.s32.totalorder %s111, %s112
      %p121 = scmp.eq.s32.totalorder %s24, 0
      %p122 = por %p120, %p121
      %p123 = scmp.ne.s32.totalorder %s111, %s112
      %p124 = scmp.eq.s32.totalorder %s25, 3
      %p125 = por %p123, %p124
      %p127 = scmp.ne.s32.totalorder %s112, %s126
      %p128 = scmp.eq.s32.totalorder %s25, 0
      %p129 = por %p127, %p128
      %s131 = sadd.s32 %s130, 1
      %p134 = scmp.eq.s32.totalorder %s19, 3
      %p135 = scmp.ne.s32.totalorder %s130, %s132
      %p136 = scmp.eq.s32.totalorder %s19, 0
      %p137 = por %p135, %p136
      %p138 = scmp.ne.s32.totalorder %s130, %s132
      %p139 = scmp.eq.s32.totalorder %s24, 3
      %p140 = por %p138, %p139
      %p141 = scmp.ne.s32.totalorder %s132, %s133
      %p142 = scmp.eq.s32.totalorder %s24, 0
      %p143 = por %p141, %p142
      %p144 = scmp.ne.s32.totalorder %s132, %s133
      %p145 = scmp.eq.s32.totalorder %s25, 3
      %p146 = por %p144, %p145
      %p148 = scmp.ne.s32.totalorder %s133, %s147
      %p149 = scmp.eq.s32.totalorder %s25, 0
      %p150 = por %p148, %p149
      %s151 = ssub.s32 %s26, %s38
      %s152 = ssub.s32 %s27, %s34
      %s153 = sor.u32 %s151, %s152
      %p154 = scmp.eq.s32.totalorder %s153, 0
      %s156 = sadd.s32 %s155, 1
      %s157 = scalar_select %p154, %s155, %s156
      %p160 = pneg %p154
      %p161 = scmp.eq.s32.totalorder %s19, 3
      %p162 = por %p160, %p161
      %p163 = scmp.ne.s32.totalorder %s155, %s158
      %p164 = scmp.eq.s32.totalorder %s19, 0
      %p165 = por %p163, %p164
      %p166 = scmp.ne.s32.totalorder %s155, %s158
      %p167 = scmp.eq.s32.totalorder %s24, 3
      %p168 = por %p166, %p167
      %p169 = scmp.ne.s32.totalorder %s158, %s159
      %p170 = scmp.eq.s32.totalorder %s24, 0
      %p171 = por %p169, %p170
      %p172 = scmp.ne.s32.totalorder %s158, %s159
      %p173 = scmp.eq.s32.totalorder %s25, 3
      %p174 = por %p172, %p173
      %p176 = scmp.ne.s32.totalorder %s159, %s175
      %p177 = scmp.eq.s32.totalorder %s25, 0
      %p178 = por %p176, %p177
      %s179 = ssub.s32 %s26, %s38
      %s180 = ssub.s32 %s27, %s34
      %s181 = sor.u32 %s179, %s180
      %p182 = scmp.eq.s32.totalorder %s181, 0
      %s184 = sadd.s32 %s183, 1
      %s185 = scalar_select %p182, %s183, %s184
      %p188 = pneg %p182
      %p189 = scmp.eq.s32.totalorder %s19, 3
      %p190 = por %p188, %p189
      %p191 = scmp.ne.s32.totalorder %s183, %s186
      %p192 = scmp.eq.s32.totalorder %s19, 0
      %p193 = por %p191, %p192
      %p194 = scmp.ne.s32.totalorder %s183, %s186
      %p195 = scmp.eq.s32.totalorder %s24, 3
      %p196 = por %p194, %p195
      %p197 = scmp.ne.s32.totalorder %s186, %s187
      %p198 = scmp.eq.s32.totalorder %s24, 0
      %p199 = por %p197, %p198
      %p200 = scmp.ne.s32.totalorder %s186, %s187
      %p201 = scmp.eq.s32.totalorder %s25, 3
      %p202 = por %p200, %p201
      %p204 = scmp.ne.s32.totalorder %s187, %s203
      %p205 = scmp.eq.s32.totalorder %s25, 0
      %p206 = por %p204, %p205
      %p207 = scmp.le.s32.totalorder 1, %s19
      %p208 = scmp.lt.s32.totalorder %s19, 5
      %p209 = pnand %p207, %p208
      %p210 = pneg %p209
      // Predicated region
      $region9: #{tpu_custom_call.1} parent=5 // pred_check
        _
      $region10: #{tpu_custom_call.1} parent=5 // pred_check_branch
        %212 = sbr.rel (%p209) target = $region12
      $region11: #{tpu_custom_call.1} parent=5 // pred_region
        %s213 = ssub.s32 %s19, 1
        // Predicated region
        $region13: #{tpu_custom_call.1} parent=11 // pred_check
          %p214 = pneg %p80
        $region14: #{tpu_custom_call.1} parent=11 // pred_check_branch
          %216 = sbr.rel (%p214) target = $region16
        $region15: #{tpu_custom_call.1} parent=11 // pred_region
          _
        $region16: #{tpu_custom_call.1} parent=11 // pred_fallthru
          _
        // Predicated region
        $region17: #{tpu_custom_call.1} parent=11 // pred_check
          %p217 = pneg %p101
        $region18: #{tpu_custom_call.1} parent=11 // pred_check_branch
          %219 = sbr.rel (%p217) target = $region20
        $region19: #{tpu_custom_call.1} parent=11 // pred_region
          _
        $region20: #{tpu_custom_call.1} parent=11 // pred_fallthru
          _
        // Predicated region
        $region21: #{tpu_custom_call.1} parent=11 // pred_check
          %p220 = pneg %p122
        $region22: #{tpu_custom_call.1} parent=11 // pred_check_branch
          %222 = sbr.rel (%p220) target = $region24
        $region23: #{tpu_custom_call.1} parent=11 // pred_region
          _
        $region24: #{tpu_custom_call.1} parent=11 // pred_fallthru
          _
        // Predicated region
        $region25: #{tpu_custom_call.1} parent=11 // pred_check
          %p223 = pneg %p143
        $region26: #{tpu_custom_call.1} parent=11 // pred_check_branch
          %225 = sbr.rel (%p223) target = $region28
        $region27: #{tpu_custom_call.1} parent=11 // pred_region
          _
        $region28: #{tpu_custom_call.1} parent=11 // pred_fallthru
          _
      $region12: #{tpu_custom_call.1} parent=5 // pred_fallthru
        _
      %p226 = scmp.lt.s32.totalorder %s19, 4
      // Predicated region
      $region29: #{tpu_custom_call.1} parent=5 // pred_check
        %p227 = pneg %p226
      $region30: #{tpu_custom_call.1} parent=5 // pred_check_branch
        %229 = sbr.rel (%p227) target = $region32
      $region31: #{tpu_custom_call.1} parent=5 // pred_region
        // Predicated region
        $region33: #{tpu_custom_call.1} parent=31 // pred_check
          %p230 = pneg %p53
        $region34: #{tpu_custom_call.1} parent=31 // pred_check_branch
          %232 = sbr.rel (%p230) target = $region36
        $region35: #{tpu_custom_call.1} parent=31 // pred_region
          %s233 = sand.u32 %s43, 1
          %s234 = scalar_lea.sflag [#allocation3], %s233
          %s235 = sand.u32 %s43, 1
          %s236 = smul.addr %s235, 32
          %s237 = scalar_lea.vmem [#allocation2], %s236
          %s239 = ssub.s32 512, 512
          %240 = vsyncadd %s234, %s239
          %s241 = smul.addr %s26, 8
          %s242 = sadd.s32 %s27, %s241
          %s243 = smul.addr %s242, 128
          %s244 = scalar_lea.hbm %s0, %s243
          %s245 = sshll.u32 %s237, 4
          %s246 = int_to_ptr.vmem [resolvable:$true] %s245
          %251 = dma.hbm_to_vmem [thread:$0]  %s244, 512, %s246, %s234, 256, 128, 8
        $region36: #{tpu_custom_call.1} parent=31 // pred_fallthru
          _
      $region32: #{tpu_custom_call.1} parent=5 // pred_fallthru
        _
      %p252 = scmp.le.s32.totalorder 1, %s19
      %p253 = scmp.lt.s32.totalorder %s19, 5
      %p254 = pnand %p252, %p253
      %p255 = pneg %p254
      // Predicated region
      $region37: #{tpu_custom_call.1} parent=5 // pred_check
        _
      $region38: #{tpu_custom_call.1} parent=5 // pred_check_branch
        %257 = sbr.rel (%p254) target = $region40
      $region39: #{tpu_custom_call.1} parent=5 // pred_region
        %s258 = ssub.s32 %s19, 1
        %s259 = sand.u32 %s46, 1
        %s260 = scalar_lea.sflag [#allocation3], %s259
        %s261 = sand.u32 %s46, 1
        %s262 = smul.addr %s261, 32
        %s263 = scalar_lea.vmem [#allocation2], %s262
        // Predicated region
        $region41: #{tpu_custom_call.1} parent=39 // pred_check
          %p264 = pneg %p59
        $region42: #{tpu_custom_call.1} parent=39 // pred_check_branch
          %266 = sbr.rel (%p264) target = $region44
        $region43: #{tpu_custom_call.1} parent=39 // pred_region
          %267 = dma.done %s260, 512
        $region44: #{tpu_custom_call.1} parent=39 // pred_fallthru
          _
        %s268 = sand.u32 %s46, 1
        %s269 = scalar_lea.sflag [#allocation3], %s268
        %s270 = sand.u32 %s46, 1
        %s271 = smul.addr %s270, 32
        %s272 = scalar_lea.vmem [#allocation2], %s271
        %p273 = pneg %p59
        %p274 = pneg %p56
        %p275 = pneg %p80
        %p276 = pneg %p77
        %p277 = pneg %p101
        %p278 = pneg %p98
        %p279 = pneg %p122
        %p280 = pneg %p119
        %p281 = pneg %p143
        %p282 = pneg %p140
        %p283 = pneg %p171
        %p284 = pneg %p168
        %s285 = sand.u32 %s158, 1
        %s286 = scalar_lea.sflag [#allocation4], %s285
        %s287 = sand.u32 %s158, 1
        %s288 = smul.addr %s287, 32
        %s289 = scalar_lea.vmem [#allocation5], %s288
        %p290 = pneg %p199
        %p291 = pneg %p196
        %s292 = smul.u32 16, %s29
        %p293 = scmp.lt.s32.totalorder %s28, 1
        %s294 = scalar_select %p293, %s28, 1
        %p295 = scmp.lt.s32.totalorder %s292, 31
        %s296 = scalar_select %p295, %s292, 31
        %s297 = smul.addr %s294, 32
        %s298 = sadd.s32 %s296, %s297
        %s299 = smul.addr %s298, 8
        %s300 = scalar_lea.vmem %s6, %s299
        %s301 = smul.u32 16, %s29
        %p302 = scmp.lt.s32.totalorder %s28, 1
        %s303 = scalar_select %p302, %s28, 1
        %p304 = scmp.lt.s32.totalorder %s301, 31
        %s305 = scalar_select %p304, %s301, 31
        %s306 = smul.addr %s303, 32
        %s307 = sadd.s32 %s305, %s306
        %s308 = smul.addr %s307, 8
        %s309 = scalar_lea.vmem %s6, %s308
        %s310 = smul.u32 16, %s29
        %v311 = vld [vmem:[%s263] sm:$0xff]
        %v312 = vld [vmem:[%s263 + $0x8] sm:$0xff]
        %v313 = vld [vmem:[%s263 + $0x10] sm:$0xff]
        %v314 = vld [vmem:[%s263 + $0x18] sm:$0xff]
        %v315 = vld [vmem:[%s1] sm:$0xff]
        %v316 = vld [vmem:[%s1 + $0x8] sm:$0xff]
        %v317 = vld [vmem:[%s1 + $0x10] sm:$0xff]
        %v318 = vld [vmem:[%s1 + $0x18] sm:$0xff]
        %v319 = vld [vmem:[%s2] sm:$0xff]
        %v320 = vld [vmem:[%s2 + $0x8] sm:$0xff]
        %v321 = vld [vmem:[%s2 + $0x10] sm:$0xff]
        %v322 = vld [vmem:[%s2 + $0x18] sm:$0xff]
        %324 = vset.pattern.permute.xlu0 0
        %325 = vperm.xlu0 %324, %v319
        %v326 = vpop.permute.xlu0 %325
        %329 = vset.pattern.permute.xlu0 0
        %330 = vperm.xlu0 %329, %v320
        %v331 = vpop.permute.xlu0 %330
        %334 = vset.pattern.permute.xlu0 0
        %335 = vperm.xlu0 %334, %v321
        %v336 = vpop.permute.xlu0 %335
        %339 = vset.pattern.permute.xlu0 0
        %340 = vperm.xlu0 %339, %v322
        %v341 = vpop.permute.xlu0 %340
        %vm343 = vcmask 261120
        %v345 = vsel %vm343, %v315, 0
        %v348 = vsel %vm343, %v316, 0
        %v351 = vsel %vm343, %v317, 0
        %v354 = vsel %vm343, %v318, 0
        %356 = vmatprep.subr.mxu0 0.0
        %357 = vmatpush1.msra.mxu0 0.0
        %358 = vmatprep.subr.mxu0 0.0
        %359 = vmatpush1.msra.mxu0 0.0
        %360 = vmatprep.subr.mxu0 0.0
        %361 = vmatpush1.msra.mxu0 0.0
        %362 = vmatprep.subr.mxu0 0.0
        %363 = vmatpush1.msra.mxu0 0.0
        %364 = vmatprep.subr.mxu0 0.0
        %365 = vmatpush1.msra.mxu0 0.0
        %366 = vmatprep.subr.mxu0 0.0
        %367 = vmatpush1.msra.mxu0 0.0
        %368 = vmatprep.subr.mxu0 0.0
        %369 = vmatpush1.msra.mxu0 0.0
        %370 = vmatprep.subr.mxu0 0.0
        %371 = vmatpush1.msra.mxu0 0.0
        %372 = vmatprep.subr.mxu0 0.0
        %373 = vmatpush1.msra.mxu0 0.0
        %374 = vmatprep.subr.mxu0 0.0
        %375 = vmatpush1.msra.mxu0 0.0
        %376 = vmatprep.subr.mxu0 0.0
        %377 = vmatpush1.msra.mxu0 0.0
        %378 = vmatprep.subr.mxu0 0.0
        %379 = vmatpush1.msra.mxu0 0.0
        %380 = vmatprep.subr.mxu0 0.0
        %381 = vmatpush1.msra.mxu0 %v314
        %382 = vmatprep.subr.mxu0 0.0
        %383 = vmatpush1.msra.mxu0 %v313
        %384 = vmatprep.subr.mxu0 0.0
        %385 = vmatpush1.msra.mxu0 %v312
        %386 = vmatprep.subr.mxu0 0.0
        %387 = vmatpush1.msra.mxu0 %v311
        %388 = vmatprep.subr.mxu0 0.0
        %389 = vmatpush2.msra.mxu0 0.0
        %390 = vmatprep.subr.mxu0 0.0
        %391 = vmatpush2.msra.mxu0 0.0
        %392 = vmatprep.subr.mxu0 0.0
        %393 = vmatpush2.msra.mxu0 0.0
        %394 = vmatprep.subr.mxu0 0.0
        %395 = vmatpush2.msra.mxu0 0.0
        %396 = vmatprep.subr.mxu0 0.0
        %397 = vmatpush2.msra.mxu0 0.0
        %398 = vmatprep.subr.mxu0 0.0
        %399 = vmatpush2.msra.mxu0 0.0
        %400 = vmatprep.subr.mxu0 0.0
        %401 = vmatpush2.msra.mxu0 0.0
        %402 = vmatprep.subr.mxu0 0.0
        %403 = vmatpush2.msra.mxu0 0.0
        %404 = vmatprep.subr.mxu0 0.0
        %405 = vmatpush2.msra.mxu0 0.0
        %406 = vmatprep.subr.mxu0 0.0
        %407 = vmatpush2.msra.mxu0 0.0
        %408 = vmatprep.subr.mxu0 0.0
        %409 = vmatpush2.msra.mxu0 0.0
        %410 = vmatprep.subr.mxu0 0.0
        %411 = vmatpush2.msra.mxu0 0.0
        %412 = vmatprep.subr.mxu0 0.0
        %413 = vmatpush2.msra.mxu0 0.0
        %414 = vmatprep.subr.mxu0 0.0
        %415 = vmatpush2.msra.mxu0 0.0
        %416 = vmatprep.subr.mxu0 0.0
        %417 = vmatpush2.msra.mxu0 0.0
        %418 = vmatprep.subr.mxu0 0.0
        %419 = vmatpush2.msra.mxu0 0.0
        %420 = vmatprep.mubr.f32.mxu0 0.0
        %421 = vmatmul.mubr.f32.gmra.mxu0 %v345
        %v422 = vpop.f32.mrf.mxu0
        %v423 = vadd.f32 %v326, %v422
        %v424 = vpop.f32.mrf.mxu0
        %425 = vmatprep.mubr.f32.mxu0 0.0
        %426 = vmatmul.mubr.f32.gmra.mxu0 %v348
        %v427 = vpop.f32.mrf.mxu0
        %v428 = vadd.f32 %v331, %v427
        %v429 = vpop.f32.mrf.mxu0
        %430 = vmatprep.mubr.f32.mxu0 0.0
        %431 = vmatmul.mubr.f32.gmra.mxu0 %v351
        %v432 = vpop.f32.mrf.mxu0
        %v433 = vadd.f32 %v336, %v432
        %v434 = vpop.f32.mrf.mxu0
        %435 = vmatprep.mubr.f32.mxu0 0.0
        %436 = vmatmul.mubr.f32.gmra.mxu0 %v354
        %v437 = vpop.f32.mrf.mxu0
        %v438 = vadd.f32 %v341, %v437
        %v439 = vpop.f32.mrf.mxu0
        %440 = vdwg.mxu0
        %v441 = vmax.f32 %v423, 0.0
        %v442 = vmax.f32 %v428, 0.0
        %v443 = vmax.f32 %v433, 0.0
        %v444 = vmax.f32 %v438, 0.0
        %445 = vst [vmem:[%s289] sm:$0xff] %v441
        %446 = vst [vmem:[%s289 + $0x8] sm:$0xff] %v442
        %447 = vst [vmem:[%s289 + $0x10] sm:$0xff] %v443
        %448 = vst [vmem:[%s289 + $0x18] sm:$0xff] %v444
        %449 = vxpose.xlu0.b32.start [1/16] %v441, 128
        %450 = vxpose.xlu0.b32.cont [2/16] %v442, 128
        %451 = vxpose.xlu0.b32.cont [3/16] %v443, 128
        %452 = vxpose.xlu0.b32.cont [4/16] %v444, 128
        %453 = vxpose.xlu0.b32.cont [5/16] 0.0, 128
        %454 = vxpose.xlu0.b32.cont [6/16] 0.0, 128
        %455 = vxpose.xlu0.b32.cont [7/16] 0.0, 128
        %456 = vxpose.xlu0.b32.cont [8/16] 0.0, 128
        %457 = vxpose.xlu0.b32.cont [9/16] 0.0, 128
        %458 = vxpose.xlu0.b32.cont [10/16] 0.0, 128
        %459 = vxpose.xlu0.b32.cont [11/16] 0.0, 128
        %460 = vxpose.xlu0.b32.cont [12/16] 0.0, 128
        %461 = vxpose.xlu0.b32.cont [13/16] 0.0, 128
        %462 = vxpose.xlu0.b32.cont [14/16] 0.0, 128
        %463 = vxpose.xlu0.b32.cont [15/16] 0.0, 128
        %464 = vxpose.xlu0.b32.end [16/16] 0.0, 128
        %v465 = vpop.trf.xlu0
        %v466 = vpop.trf.xlu0
        %v467 = vpop.trf.xlu0
        %v468 = vpop.trf.xlu0
        %v469 = vpop.trf.xlu0
        %v470 = vpop.trf.xlu0
        %v471 = vpop.trf.xlu0
        %v472 = vpop.trf.xlu0
        %v473 = vpop.trf.xlu0
        %v474 = vpop.trf.xlu0
        %v475 = vpop.trf.xlu0
        %v476 = vpop.trf.xlu0
        %v477 = vpop.trf.xlu0
        %v478 = vpop.trf.xlu0
        %v479 = vpop.trf.xlu0
        %v480 = vpop.trf.xlu0
        %v481 = vld [vmem:[%s3] sm:$0xff]
        %v482 = vld [vmem:[%s3 + $0x8] sm:$0xff]
        %v483 = vld [vmem:[%s3 + $0x10] sm:$0xff]
        %v484 = vld [vmem:[%s3 + $0x18] sm:$0xff]
        %v485 = vld [vmem:[%s4] sm:$0x1]
        %v487 = vlaneseq
        %v488 = vshrl.u32 %v487, 7
        %v489 = vsub.s32 0, %v488
        %v490 = vrot.slane %v485, %v489
        %v493 = vsel %vm343, %v465, 0
        %v496 = vsel %vm343, %v466, 0
        %v499 = vsel %vm343, %v467, 0
        %v502 = vsel %vm343, %v468, 0
        %v505 = vsel %vm343, %v469, 0
        %v508 = vsel %vm343, %v470, 0
        %v511 = vsel %vm343, %v471, 0
        %v514 = vsel %vm343, %v472, 0
        %v517 = vsel %vm343, %v473, 0
        %v520 = vsel %vm343, %v474, 0
        %v523 = vsel %vm343, %v475, 0
        %v526 = vsel %vm343, %v476, 0
        %v529 = vsel %vm343, %v477, 0
        %v532 = vsel %vm343, %v478, 0
        %v535 = vsel %vm343, %v479, 0
        %v538 = vsel %vm343, %v480, 0
        %540 = vmatprep.subr.mxu0 0.0
        %541 = vmatpush1.msra.mxu0 0.0
        %542 = vmatprep.subr.mxu0 0.0
        %543 = vmatpush1.msra.mxu0 0.0
        %544 = vmatprep.subr.mxu0 0.0
        %545 = vmatpush1.msra.mxu0 0.0
        %546 = vmatprep.subr.mxu0 0.0
        %547 = vmatpush1.msra.mxu0 0.0
        %548 = vmatprep.subr.mxu0 0.0
        %549 = vmatpush1.msra.mxu0 0.0
        %550 = vmatprep.subr.mxu0 0.0
        %551 = vmatpush1.msra.mxu0 0.0
        %552 = vmatprep.subr.mxu0 0.0
        %553 = vmatpush1.msra.mxu0 0.0
        %554 = vmatprep.subr.mxu0 0.0
        %555 = vmatpush1.msra.mxu0 0.0
        %556 = vmatprep.subr.mxu0 0.0
        %557 = vmatpush1.msra.mxu0 0.0
        %558 = vmatprep.subr.mxu0 0.0
        %559 = vmatpush1.msra.mxu0 0.0
        %560 = vmatprep.subr.mxu0 0.0
        %561 = vmatpush1.msra.mxu0 0.0
        %562 = vmatprep.subr.mxu0 0.0
        %563 = vmatpush1.msra.mxu0 0.0
        %564 = vmatprep.subr.mxu0 0.0
        %565 = vmatpush1.msra.mxu0 %v484
        %566 = vmatprep.subr.mxu0 0.0
        %567 = vmatpush1.msra.mxu0 %v483
        %568 = vmatprep.subr.mxu0 0.0
        %569 = vmatpush1.msra.mxu0 %v482
        %570 = vmatprep.subr.mxu0 0.0
        %571 = vmatpush1.msra.mxu0 %v481
        %572 = vmatprep.subr.mxu0 0.0
        %573 = vmatpush2.msra.mxu0 0.0
        %574 = vmatprep.subr.mxu0 0.0
        %575 = vmatpush2.msra.mxu0 0.0
        %576 = vmatprep.subr.mxu0 0.0
        %577 = vmatpush2.msra.mxu0 0.0
        %578 = vmatprep.subr.mxu0 0.0
        %579 = vmatpush2.msra.mxu0 0.0
        %580 = vmatprep.subr.mxu0 0.0
        %581 = vmatpush2.msra.mxu0 0.0
        %582 = vmatprep.subr.mxu0 0.0
        %583 = vmatpush2.msra.mxu0 0.0
        %584 = vmatprep.subr.mxu0 0.0
        %585 = vmatpush2.msra.mxu0 0.0
        %586 = vmatprep.subr.mxu0 0.0
        %587 = vmatpush2.msra.mxu0 0.0
        %588 = vmatprep.subr.mxu0 0.0
        %589 = vmatpush2.msra.mxu0 0.0
        %590 = vmatprep.subr.mxu0 0.0
        %591 = vmatpush2.msra.mxu0 0.0
        %592 = vmatprep.subr.mxu0 0.0
        %593 = vmatpush2.msra.mxu0 0.0
        %594 = vmatprep.subr.mxu0 0.0
        %595 = vmatpush2.msra.mxu0 0.0
        %596 = vmatprep.subr.mxu0 0.0
        %597 = vmatpush2.msra.mxu0 0.0
        %598 = vmatprep.subr.mxu0 0.0
        %599 = vmatpush2.msra.mxu0 0.0
        %600 = vmatprep.subr.mxu0 0.0
        %601 = vmatpush2.msra.mxu0 0.0
        %602 = vmatprep.subr.mxu0 0.0
        %603 = vmatpush2.msra.mxu0 0.0
        %604 = vmatprep.mubr.f32.mxu0 0.0
        %605 = vmatmul.mubr.f32.gmra.mxu0 %v493
        %v606 = vpop.f32.mrf.mxu0
        %v607 = vadd.f32 %v490, %v606
        %v608 = vpop.f32.mrf.mxu0
        %609 = vmatprep.mubr.f32.mxu0 0.0
        %610 = vmatmul.mubr.f32.gmra.mxu0 %v496
        %v611 = vpop.f32.mrf.mxu0
        %v612 = vadd.f32 %v490, %v611
        %v613 = vpop.f32.mrf.mxu0
        %614 = vmatprep.mubr.f32.mxu0 0.0
        %615 = vmatmul.mubr.f32.gmra.mxu0 %v499
        %v616 = vpop.f32.mrf.mxu0
        %v617 = vadd.f32 %v490, %v616
        %v618 = vpop.f32.mrf.mxu0
        %619 = vmatprep.mubr.f32.mxu0 0.0
        %620 = vmatmul.mubr.f32.gmra.mxu0 %v502
        %v621 = vpop.f32.mrf.mxu0
        %v622 = vadd.f32 %v490, %v621
        %v623 = vpop.f32.mrf.mxu0
        %624 = vmatprep.mubr.f32.mxu0 0.0
        %625 = vmatmul.mubr.f32.gmra.mxu0 %v505
        %v626 = vpop.f32.mrf.mxu0
        %v627 = vadd.f32 %v490, %v626
        %v628 = vpop.f32.mrf.mxu0
        %629 = vmatprep.mubr.f32.mxu0 0.0
        %630 = vmatmul.mubr.f32.gmra.mxu0 %v508
        %v631 = vpop.f32.mrf.mxu0
        %v632 = vadd.f32 %v490, %v631
        %v633 = vpop.f32.mrf.mxu0
        %634 = vmatprep.mubr.f32.mxu0 0.0
        %635 = vmatmul.mubr.f32.gmra.mxu0 %v511
        %v636 = vpop.f32.mrf.mxu0
        %v637 = vadd.f32 %v490, %v636
        %v638 = vpop.f32.mrf.mxu0
        %639 = vmatprep.mubr.f32.mxu0 0.0
        %640 = vmatmul.mubr.f32.gmra.mxu0 %v514
        %v641 = vpop.f32.mrf.mxu0
        %v642 = vadd.f32 %v490, %v641
        %v643 = vpop.f32.mrf.mxu0
        %644 = vmatprep.mubr.f32.mxu0 0.0
        %645 = vmatmul.mubr.f32.gmra.mxu0 %v517
        %v646 = vpop.f32.mrf.mxu0
        %v647 = vadd.f32 %v490, %v646
        %v648 = vpop.f32.mrf.mxu0
        %649 = vmatprep.mubr.f32.mxu0 0.0
        %650 = vmatmul.mubr.f32.gmra.mxu0 %v520
        %v651 = vpop.f32.mrf.mxu0
        %v652 = vadd.f32 %v490, %v651
        %v653 = vpop.f32.mrf.mxu0
        %654 = vmatprep.mubr.f32.mxu0 0.0
        %655 = vmatmul.mubr.f32.gmra.mxu0 %v523
        %v656 = vpop.f32.mrf.mxu0
        %v657 = vadd.f32 %v490, %v656
        %v658 = vpop.f32.mrf.mxu0
        %659 = vmatprep.mubr.f32.mxu0 0.0
        %660 = vmatmul.mubr.f32.gmra.mxu0 %v526
        %v661 = vpop.f32.mrf.mxu0
        %v662 = vadd.f32 %v490, %v661
        %v663 = vpop.f32.mrf.mxu0
        %664 = vmatprep.mubr.f32.mxu0 0.0
        %665 = vmatmul.mubr.f32.gmra.mxu0 %v529
        %v666 = vpop.f32.mrf.mxu0
        %v667 = vadd.f32 %v490, %v666
        %v668 = vpop.f32.mrf.mxu0
        %669 = vmatprep.mubr.f32.mxu0 0.0
        %670 = vmatmul.mubr.f32.gmra.mxu0 %v532
        %v671 = vpop.f32.mrf.mxu0
        %v672 = vadd.f32 %v490, %v671
        %v673 = vpop.f32.mrf.mxu0
        %674 = vmatprep.mubr.f32.mxu0 0.0
        %675 = vmatmul.mubr.f32.gmra.mxu0 %v535
        %v676 = vpop.f32.mrf.mxu0
        %v677 = vadd.f32 %v490, %v676
        %v678 = vpop.f32.mrf.mxu0
        %679 = vmatprep.mubr.f32.mxu0 0.0
        %680 = vmatmul.mubr.f32.gmra.mxu0 %v538
        %v681 = vpop.f32.mrf.mxu0
        %v682 = vadd.f32 %v490, %v681
        %v683 = vpop.f32.mrf.mxu0
        %684 = vdwg.mxu0
        %vm685 = vcmask 64512
        %686 = vst.msk [vmem:[%s309] sm:$0xff] %vm685, %v607
        %687 = vst.msk [vmem:[%s309 + $0x8] sm:$0xff] %vm685, %v612
        %688 = vst.msk [vmem:[%s309 + $0x10] sm:$0xff] %vm685, %v617
        %689 = vst.msk [vmem:[%s309 + $0x18] sm:$0xff] %vm685, %v622
        %690 = vst.msk [vmem:[%s309 + $0x20] sm:$0xff] %vm685, %v627
        %691 = vst.msk [vmem:[%s309 + $0x28] sm:$0xff] %vm685, %v632
        %692 = vst.msk [vmem:[%s309 + $0x30] sm:$0xff] %vm685, %v637
        %693 = vst.msk [vmem:[%s309 + $0x38] sm:$0xff] %vm685, %v642
        %694 = vst.msk [vmem:[%s309 + $0x40] sm:$0xff] %vm685, %v647
        %695 = vst.msk [vmem:[%s309 + $0x48] sm:$0xff] %vm685, %v652
        %696 = vst.msk [vmem:[%s309 + $0x50] sm:$0xff] %vm685, %v657
        %697 = vst.msk [vmem:[%s309 + $0x58] sm:$0xff] %vm685, %v662
        %698 = vst.msk [vmem:[%s309 + $0x60] sm:$0xff] %vm685, %v667
        %699 = vst.msk [vmem:[%s309 + $0x68] sm:$0xff] %vm685, %v672
        %700 = vst.msk [vmem:[%s309 + $0x70] sm:$0xff] %vm685, %v677
        %701 = vst.msk [vmem:[%s309 + $0x78] sm:$0xff] %vm685, %v682
        %s702 = sand.u32 %s158, 1
        %s703 = scalar_lea.sflag [#allocation4], %s702
        %s704 = sand.u32 %s158, 1
        %s705 = smul.addr %s704, 32
        %s706 = scalar_lea.vmem [#allocation5], %s705
        %s707 = smul.u32 16, %s29
        %p708 = scmp.lt.s32.totalorder %s28, 1
        %s709 = scalar_select %p708, %s28, 1
        %p710 = scmp.lt.s32.totalorder %s707, 31
        %s711 = scalar_select %p710, %s707, 31
        %s712 = smul.addr %s709, 32
        %s713 = sadd.s32 %s711, %s712
        %s714 = smul.addr %s713, 8
        %s715 = scalar_lea.vmem %s6, %s714
        // Predicated region
        $region45: #{tpu_custom_call.1} parent=39 // pred_check
          %p716 = pneg %p168
        $region46: #{tpu_custom_call.1} parent=39 // pred_check_branch
          %718 = sbr.rel (%p716) target = $region48
        $region47: #{tpu_custom_call.1} parent=39 // pred_region
          %s720 = ssub.s32 512, 512
          %721 = vsyncadd %s703, %s720
          %s722 = smul.addr %s28, 8
          %s723 = sadd.s32 %s29, %s722
          %s724 = smul.addr %s723, 128
          %s725 = scalar_lea.hbm %s5, %s724
          %s726 = sshll.u32 %s706, 4
          %s727 = int_to_ptr.vmem [resolvable:$true] %s726
          %732 = dma.vmem_to_hbm [thread:$0]  %s727, 512, %s725, %s703, 128, 256, 8
        $region48: #{tpu_custom_call.1} parent=39 // pred_fallthru
          _
        // Predicated region
        $region49: #{tpu_custom_call.1} parent=39 // pred_check
          %p733 = pneg %p196
        $region50: #{tpu_custom_call.1} parent=39 // pred_check_branch
          %735 = sbr.rel (%p733) target = $region52
        $region51: #{tpu_custom_call.1} parent=39 // pred_region
          %s736 = smul.u32 16, %s29
        $region52: #{tpu_custom_call.1} parent=39 // pred_fallthru
          _
      $region40: #{tpu_custom_call.1} parent=5 // pred_fallthru
        _
      %p737 = scmp.le.s32.totalorder 2, %s19
      // Predicated region
      $region53: #{tpu_custom_call.1} parent=5 // pred_check
        %p738 = pneg %p737
      $region54: #{tpu_custom_call.1} parent=5 // pred_check_branch
        %740 = sbr.rel (%p738) target = $region56
      $region55: #{tpu_custom_call.1} parent=5 // pred_region
        %s741 = ssub.s32 %s19, 2
        // Predicated region
        $region57: #{tpu_custom_call.1} parent=55 // pred_check
          %p742 = pneg %p174
        $region58: #{tpu_custom_call.1} parent=55 // pred_check_branch
          %744 = sbr.rel (%p742) target = $region60
        $region59: #{tpu_custom_call.1} parent=55 // pred_region
          %s745 = sand.u32 %s159, 1
          %s746 = scalar_lea.sflag [#allocation4], %s745
          %s747 = sand.u32 %s159, 1
          %s748 = smul.addr %s747, 32
          %s749 = scalar_lea.vmem [#allocation5], %s748
          %750 = dma.done %s746, 512
        $region60: #{tpu_custom_call.1} parent=55 // pred_fallthru
          _
        // Predicated region
        $region61: #{tpu_custom_call.1} parent=55 // pred_check
          %p751 = pneg %p202
        $region62: #{tpu_custom_call.1} parent=55 // pred_check_branch
          %753 = sbr.rel (%p751) target = $region64
        $region63: #{tpu_custom_call.1} parent=55 // pred_region
          %s754 = smul.u32 16, %s31
          %p755 = scmp.lt.s32.totalorder %s30, 1
          %s756 = scalar_select %p755, %s30, 1
          %p757 = scmp.lt.s32.totalorder %s754, 31
          %s758 = scalar_select %p757, %s754, 31
          %s759 = smul.addr %s756, 32
          %s760 = sadd.s32 %s758, %s759
          %s761 = smul.addr %s760, 8
          %s762 = scalar_lea.vmem %s6, %s761
        $region64: #{tpu_custom_call.1} parent=55 // pred_fallthru
          _
      $region56: #{tpu_custom_call.1} parent=5 // pred_fallthru
        _
    $region6: #{tpu_custom_call.1} parent=1 // loop_footer
      %s23 = sadd.s32 1, %s19
    $region7: #{tpu_custom_call.1} parent=1 // loop_footer_branch
      %18 = sbr.rel target = $region3
    $region8: #{tpu_custom_call.1} parent=1 // loop_exit
      _
    %763 = vsyncpa [#allocation3], 1
    %s764 = scalar_lea.sflag [#allocation3], 1
    %765 = vsyncpa %s764, 1
    %766 = vsyncpa [#allocation4], 1
    %s767 = scalar_lea.sflag [#allocation4], 1
    %768 = vsyncpa %s767, 1

</llo_original>
